<compile_context>
chip_gen: v6e
topology: v6e:2x2x1
jax: 0.10.0
libtpu: 0.0.40
codegen_flags: <defaults>
</compile_context>

<pallas_src>
import functools

import jax
import jax.numpy as jnp
from jax.experimental import pallas as pl
from jax.experimental.pallas import tpu as pltpu

_LANES = 128
_TARGET_BLOCK_BYTES = 2 * 1024 * 1024   # <= 8 MiB resident (in+out, 2x buffered)
_MIN_BLOCK_BYTES = 512 * 1024           # amortization floor for per-step overhead
_DESIRED_GRID_STEPS = 8                 # give v7x's 2 TensorCores >= 4 steps each

_SUPPORTED = ("relu", "prelu", "lrelu", "tanh", "sigmoid")


def _act_kernel(x_ref, o_ref, *, activation, negative_slope):
    x = x_ref[...]
    if activation == "relu":
        # Native-dtype max: no f32 round trip (bf16 stays bf16, ints stay ints).
        y = jnp.maximum(x, 0)
    elif activation in ("prelu", "lrelu"):
        # Slope is a compile-time constant (weakly typed) -> native-dtype mul/select.
        y = jnp.where(x >= 0, x, x * negative_slope)
    elif activation == "tanh":
        y = jnp.tanh(x.astype(jnp.float32))
    elif activation == "sigmoid":
        # sigmoid(x) = 0.5*(tanh(x/2)+1): one EUP op instead of exp + exact divide.
        y = 0.5 * (jnp.tanh(0.5 * x.astype(jnp.float32)) + 1.0)
    else:
        y = x
    o_ref[...] = y.astype(o_ref.dtype)


def _sublane_for(itemsize):
    # Sub-32-bit dtypes pack along sublanes: 8 f32 / 16 bf16 / 32 int8 rows per vreg.
    return {4: 8, 2: 16, 1: 32}.get(itemsize, 8)


def _pick_block_rows(rows, sublane, itemsize):
    bytes_per_row = _LANES * itemsize
    target = max(sublane, (_TARGET_BLOCK_BYTES // bytes_per_row) // sublane * sublane)
    floor_rows = max(sublane, (_MIN_BLOCK_BYTES // bytes_per_row) // sublane * sublane)
    # Aim for >= _DESIRED_GRID_STEPS grid steps so the "parallel" grid axis can
    # shard across v7x's two TensorCores, but never shrink a block below the
    # overhead-amortization floor.
    desired = pl.cdiv(pl.cdiv(rows, _DESIRED_GRID_STEPS), sublane) * sublane
    block_rows = min(target, max(floor_rows, desired))
    # Never let the block exceed the array; the final grid step may still be a
    # partial block, which Pallas masks.
    return min(block_rows, max(sublane, (rows // sublane) * sublane))


def _run_elementwise(x2d, activation, negative_slope):
    rows, lanes = x2d.shape
    dtype = x2d.dtype
    itemsize = jnp.dtype(dtype).itemsize
    sublane = _sublane_for(itemsize)
    block_rows = _pick_block_rows(rows, sublane, itemsize)
    grid = (pl.cdiv(rows, block_rows),)
    spec = pl.BlockSpec((block_rows, lanes), lambda i: (i, 0))

    n_eff = rows * lanes
    cost = pl.CostEstimate(
        flops=2 * n_eff,
        transcendentals=n_eff if activation in ("tanh", "sigmoid") else 0,
        bytes_accessed=2 * n_eff * itemsize,   # actual streamed traffic
    )
    kernel = functools.partial(
        _act_kernel, activation=activation, negative_slope=negative_slope)
    return pl.pallas_call(
        kernel,
        out_shape=jax.ShapeDtypeStruct((rows, lanes), dtype),
        grid=grid,
        in_specs=[spec],
        out_specs=spec,
        compiler_params=pltpu.CompilerParams(dimension_semantics=("parallel",)),
        cost_estimate=cost,
    )(x2d)


@functools.partial(jax.jit, static_argnames=("activation", "prelu_weight"))
def activation_forward(x, activation=None, prelu_weight=0.25):
    """Mirror of Activation.forward(x); elementwise over any input shape."""
    # None / unrecognized activation -> identity, matching the PyTorch module.
    if activation not in _SUPPORTED:
        return x
    n = x.size
    if n == 0:
        return x

    negative_slope = 0.2 if activation == "lrelu" else float(prelu_weight)
    # TODO(synk): prelu_weight is baked in as a static scalar (torch.nn.PReLU()
    # default num_parameters=1); a traced or per-channel weight would need a
    # scalar-prefetch / channel-tiled variant.

    dtype = x.dtype
    itemsize = jnp.dtype(dtype).itemsize
    sublane = _sublane_for(itemsize)
    rows = n // _LANES

    if n % _LANES == 0 and rows >= sublane:
        # Copy-free path: lane-dense view; the (rows, 128) reshape is a
        # layout-preserving bitcast and any rows % block_rows remainder is a
        # masked partial final block -- no pad, no output slice.
        out2d = _run_elementwise(x.reshape(rows, _LANES), activation, negative_slope)
        return out2d.reshape(x.shape)

    # Ragged fallback: pad the flat view up to a single (sublane x 128) granule.
    # TODO(synk): for *large* ragged sizes this pad/slice still costs an extra
    # HBM pass; such shapes are rare for this module's conv-stack usage.
    rows_rounded = pl.cdiv(pl.cdiv(n, _LANES), sublane) * sublane
    padded = rows_rounded * _LANES
    x_flat = jnp.pad(x.reshape(-1), (0, padded - n))
    out2d = _run_elementwise(
        x_flat.reshape(rows_rounded, _LANES), activation, negative_slope)
    return out2d.reshape(-1)[:n].reshape(x.shape)


def _reference(x, activation, prelu_weight=0.25):
    if activation == "relu":
        return jnp.maximum(x, 0)
    if activation == "prelu":
        return jnp.where(x >= 0, x, prelu_weight * x)
    if activation == "lrelu":
        return jnp.where(x >= 0, x, 0.2 * x)
    if activation == "tanh":
        return jnp.tanh(x)
    if activation == "sigmoid":
        return jax.nn.sigmoid(x)
    return x


if __name__ == "__main__":
    key = jax.random.PRNGKey(0)
    k1, k2, k3 = jax.random.split(key, 3)
    # NCHW inputs consistent with typical conv-stack usage of this module.
    x = jax.random.normal(k1, (2, 4, 16, 16), dtype=jnp.float32)        # lane-dense path
    x_ragged = jax.random.normal(k2, (3, 5, 7, 9), dtype=jnp.float32)   # ragged fallback
    x_bf16 = jax.random.normal(k3, (2, 4, 16, 16), dtype=jnp.bfloat16)  # native bf16 path

    prelu_w = 0.25  # PyTorch PReLU default init

    ok = True
    for act in ["relu", "prelu", "lrelu", "tanh", "sigmoid", None]:
        for inp in (x, x_ragged, x_bf16):
            y = jax.block_until_ready(
                activation_forward(inp, activation=act, prelu_weight=prelu_w))
            y_ref = _reference(inp, act, prelu_w)
            if y.shape != inp.shape or y.dtype != inp.dtype:
                ok = False
            atol, rtol = (1e-2, 1e-2) if inp.dtype == jnp.bfloat16 else (1e-5, 1e-5)
            if not jnp.allclose(y.astype(jnp.float32), y_ref.astype(jnp.float32),
                                atol=atol, rtol=rtol):
                ok = False

    if ok:
        print("KERNEL_OK")
</pallas_src>

<mosaic_0001>
module attributes {stable_mosaic.version = 11 : i64} {
  func.func @_act_kernel(%arg0: i32, %arg1: memref<16x128xf32, #tpu.memory_space<vmem>>, %arg2: memref<16x128xf32, #tpu.memory_space<vmem>>) attributes {dimension_semantics = [#tpu.dimension_semantics<parallel>], iteration_bounds = array<i64: 1>, scalar_prefetch = 0 : i64, scratch_operands = 0 : i64, tpu.core_type = #tpu.core_type<tc>, window_params = [{transform_indices = @transform_0, window_bounds = array<i64: 16, 128>}, {transform_indices = @transform_1, window_bounds = array<i64: 16, 128>}]} {
    %c0 = arith.constant 0 : index
    %c0_0 = arith.constant 0 : index
    %0 = vector.load %arg1[%c0, %c0_0] : memref<16x128xf32, #tpu.memory_space<vmem>>, vector<16x128xf32>
    %cst = arith.constant 0.000000e+00 : f32
    %1 = vector.broadcast %cst : f32 to vector<16x128xf32>
    %2 = arith.maximumf %0, %1 : vector<16x128xf32>
    %c0_1 = arith.constant 0 : index
    %c0_2 = arith.constant 0 : index
    %3 = vector.load %arg2[%c0_1, %c0_2] : memref<16x128xf32, #tpu.memory_space<vmem>>, vector<16x128xf32>
    tpu.vector_store %arg2[%c0_1, %c0_2], %2 {strides = array<i32>} : memref<16x128xf32, #tpu.memory_space<vmem>>, vector<16x128xf32>,
    return
  }
  func.func @transform_0(%arg0: i32) -> (i32, i32) {
    %c0_i32 = arith.constant 0 : i32
    %c0_i32_0 = arith.constant 0 : i32
    return %arg0, %c0_i32 : i32, i32
  }
  func.func @transform_1(%arg0: i32) -> (i32, i32) {
    %c0_i32 = arith.constant 0 : i32
    %c0_i32_0 = arith.constant 0 : i32
    return %arg0, %c0_i32 : i32, i32
  }
}

</mosaic_0001>

<llo_original>
// kernel: activation_forward.1
$region0: #{activation_forward.1}
  #allocation0 [shape = 'u32[]', space=smem, size = 0x4, offset = 0x4, fixed_abs, tag = 'smem constant byte address 0x4 - core index']
  #allocation1 [shape = 'u32[144,128]{1,0:T(1,128)}', space=vmem, size = 0x12000, scoped, tag = 'internal scratch']
  %s0 = inlined_call_operand.vmem [shape: f32[16,128], index: 0, kind: input, shape index: {}]
  %s1 = inlined_call_operand.vmem [shape: f32[16,128], index: 1, kind: output, shape index: {}]
  %s2 = sld [smem:[#allocation0]]
  $region14: #{activation_forward.1} parent=0
    _
  %s4 = ssub.s32 1, %s2
  %s5 = scalar_select 0, %s4, %s2
  // Predicated region
  $region2: #{activation_forward.1} parent=0 // pred_check
    _
  $region3: #{activation_forward.1} parent=0 // pred_check_branch
    %7 = sbr.rel (0) target = $region5
  $region4: #{activation_forward.1} parent=0 // pred_region
    _
  $region5: #{activation_forward.1} parent=0 // pred_fallthru
    _
  %v8 = vld [vmem:[%s0] sm:$0xff]
  %v9 = vld [vmem:[%s0 + $0x8] sm:$0xff]
  %v10 = vmax.f32 %v8, 0.0
  %v11 = vmax.f32 %v9, 0.0
  %12 = vst [vmem:[%s1] sm:$0xff] %v10
  %13 = vst [vmem:[%s1 + $0x8] sm:$0xff] %v11
  // Predicated region
  $region6: #{activation_forward.1} parent=0 // pred_check
    _
  $region7: #{activation_forward.1} parent=0 // pred_check_branch
    %15 = sbr.rel (0) target = $region9
  $region8: #{activation_forward.1} parent=0 // pred_region
    _
  $region9: #{activation_forward.1} parent=0 // pred_fallthru
    _
  // Predicated region
  $region10: #{activation_forward.1} parent=0 // pred_check
    _
  $region11: #{activation_forward.1} parent=0 // pred_check_branch
    %17 = sbr.rel (0) target = $region13
  $region12: #{activation_forward.1} parent=0 // pred_region
    _
  $region13: #{activation_forward.1} parent=0 // pred_fallthru
    _

</llo_original>
